<compile_context>
chip_gen: v7x
topology: tpu7x:2x2x1
jax: 0.10.0
libtpu: 0.0.40
codegen_flags: <defaults>
</compile_context>

<pallas_src>
import jax
import jax.numpy as jnp
from jax.experimental import pallas as pl
from jax.experimental.pallas import tpu as pltpu

BN_EPS = 1e-5
LANE = 128
ROW_ALIGN = 16          # bf16 sublane packing -> keep row tiles 16-aligned


def _round_up(n, m):
    return (n + m - 1) // m * m


# ---------------------------------------------------------------------------
# Kernel: 3 lane-dense bf16 matmuls (f32 accumulate) + relu/relu/tanh.
# BN is already folded into w/b; padded columns stay exactly zero.
# ---------------------------------------------------------------------------
def _policy_mean_kernel(x_ref, w1_ref, b1_ref, w2_ref, b2_ref, w3_ref, b3_ref,
                        mean_ref):
    h = jnp.dot(x_ref[...], w1_ref[...], preferred_element_type=jnp.float32)
    h = jnp.maximum(h + b1_ref[...], 0.0).astype(jnp.bfloat16)

    h = jnp.dot(h, w2_ref[...], preferred_element_type=jnp.float32)
    h = jnp.maximum(h + b2_ref[...], 0.0).astype(jnp.bfloat16)

    out = jnp.dot(h, w3_ref[...], preferred_element_type=jnp.float32) + b3_ref[...]
    # Padded action columns hold tanh(0) = 0 and are sliced off by the wrapper.
    mean_ref[...] = jnp.tanh(out).astype(mean_ref.dtype)


# ---------------------------------------------------------------------------
# One-time parameter prep: fold eval-mode BatchNorm into Linear (in f32),
# zero-pad to lane-dense shapes, cast weights to bf16 (biases stay f32).
# Call once per policy; reuse the returned dict for every forward.
# ---------------------------------------------------------------------------
def prepare_policy_params(p):
    # BN(eval): y = (z - m) * g * rsqrt(v + eps) + beta, with z = x @ w + b
    #   ==  x @ (w * s) + ((b - m) * s + beta),  s = g * rsqrt(v + eps)
    s1 = p["g1"] * jax.lax.rsqrt(p["v1"] + BN_EPS)
    w1 = p["w1"] * s1
    b1 = (p["b1"] - p["m1"]) * s1 + p["be1"]

    s2 = p["g2"] * jax.lax.rsqrt(p["v2"] + BN_EPS)
    w2 = p["w2"] * s2
    b2 = (p["b2"] - p["m2"]) * s2 + p["be2"]

    w3, b3 = p["w3"], p["b3"]

    S, H1 = w1.shape
    H2 = w2.shape[1]
    A = w3.shape[1]
    H1p = _round_up(H1, LANE)   # 200 -> 256
    H2p = _round_up(H2, LANE)   # 128 -> 128
    Ap = _round_up(A, LANE)     # 4   -> 128 (lane-dense output store)

    w1 = jnp.pad(w1, ((0, 0), (0, H1p - H1)))
    b1 = jnp.pad(b1, ((0, 0), (0, H1p - H1)))
    w2 = jnp.pad(w2, ((0, H1p - H1), (0, H2p - H2)))
    b2 = jnp.pad(b2, ((0, 0), (0, H2p - H2)))
    w3 = jnp.pad(w3, ((0, H2p - H2), (0, Ap - A)))
    b3 = jnp.pad(b3, ((0, 0), (0, Ap - A)))

    return {
        "w1": w1.astype(jnp.bfloat16), "b1": b1.astype(jnp.float32),
        "w2": w2.astype(jnp.bfloat16), "b2": b2.astype(jnp.float32),
        "w3": w3.astype(jnp.bfloat16), "b3": b3.astype(jnp.float32),
        "log_std": p["log_std"].astype(jnp.float32),
    }


# ---------------------------------------------------------------------------
# Wrapper (jit-friendly): x (B, S) f32 -> (action_mean, action_log_std, action_std)
# ---------------------------------------------------------------------------
def policy_forward(x, prep, *, block_batch=1024):
    B, S = x.shape
    w1, b1 = prep["w1"], prep["b1"]
    w2, b2 = prep["w2"], prep["b2"]
    w3, b3 = prep["w3"], prep["b3"]
    Sw, H1p = w1.shape
    H2p = w2.shape[1]
    Ap = w3.shape[1]
    A = prep["log_std"].shape[-1]
    assert S == Sw, "state_dim mismatch"

    # Tile selection: minimize batch padding, and use >= 2 grid steps for moderate
    # batches so the "parallel" axis can shard across v7x's two TensorCores.
    num_tiles = -(-B // block_batch)
    if B >= 2 * ROW_ALIGN:
        num_tiles = max(num_tiles, 2)
    TB = _round_up(-(-B // num_tiles), ROW_ALIGN)
    Bp = _round_up(B, TB)

    xb = x.astype(jnp.bfloat16)
    if Bp != B:
        xb = jnp.pad(xb, ((0, Bp - B), (0, 0)))

    const = lambda i: (0, 0)  # weights stay VMEM-resident across batch tiles

    mean_padded = pl.pallas_call(
        _policy_mean_kernel,
        out_shape=jax.ShapeDtypeStruct((Bp, Ap), jnp.bfloat16),
        grid=(Bp // TB,),
        in_specs=[
            pl.BlockSpec((TB, S), lambda i: (i, 0)),   # x, pipelined along batch
            pl.BlockSpec((S, H1p), const),
            pl.BlockSpec((1, H1p), const),
            pl.BlockSpec((H1p, H2p), const),
            pl.BlockSpec((1, H2p), const),
            pl.BlockSpec((H2p, Ap), const),
            pl.BlockSpec((1, Ap), const),
        ],
        out_specs=pl.BlockSpec((TB, Ap), lambda i: (i, 0)),
        compiler_params=pltpu.CompilerParams(dimension_semantics=("parallel",)),
    )(xb, w1, b1, w2, b2, w3, b3)

    action_mean = mean_padded[:B, :A].astype(jnp.float32)

    # In eval mode log_std / std do not depend on x: trivial constants, done in XLA.
    log_std = jnp.broadcast_to(prep["log_std"], (B, A))
    std = jnp.exp(log_std)
    return action_mean, log_std, std


# ---------------------------------------------------------------------------
# Synthetic params + pure-JAX reference for validation
# ---------------------------------------------------------------------------
def init_params(key, state_dim, action_dim, hidden_size=(200, 128), log_std=0.0):
    keys = jax.random.split(key, 8)
    h1, h2 = hidden_size

    def lin(k, fan_in, fan_out):
        w = jax.random.normal(k, (fan_in, fan_out), jnp.float32) * (1.0 / jnp.sqrt(fan_in))
        b = jnp.zeros((1, fan_out), jnp.float32)
        return w, b

    w1, b1 = lin(keys[0], state_dim, h1)
    w2, b2 = lin(keys[1], h1, h2)
    w3, b3 = lin(keys[2], h2, action_dim)

    def bn(k, n):
        g = jnp.ones((1, n), jnp.float32)
        be = jnp.zeros((1, n), jnp.float32)
        m = 0.1 * jax.random.normal(k, (1, n), jnp.float32)
        v = jnp.ones((1, n), jnp.float32) + 0.05 * jax.random.uniform(k, (1, n), jnp.float32)
        return g, be, m, v

    g1, be1, m1, v1 = bn(keys[3], h1)
    g2, be2, m2, v2 = bn(keys[4], h2)

    return {
        "w1": w1, "b1": b1, "g1": g1, "be1": be1, "m1": m1, "v1": v1,
        "w2": w2, "b2": b2, "g2": g2, "be2": be2, "m2": m2, "v2": v2,
        "w3": w3, "b3": b3,
        "log_std": jnp.full((1, action_dim), log_std, jnp.float32),
    }


def policy_forward_ref(x, p):
    h = x @ p["w1"] + p["b1"]
    h = (h - p["m1"]) / jnp.sqrt(p["v1"] + BN_EPS) * p["g1"] + p["be1"]
    h = jnp.maximum(h, 0.0)
    h = h @ p["w2"] + p["b2"]
    h = (h - p["m2"]) / jnp.sqrt(p["v2"] + BN_EPS) * p["g2"] + p["be2"]
    h = jnp.maximum(h, 0.0)
    mean = jnp.tanh(h @ p["w3"] + p["b3"])
    log_std = jnp.broadcast_to(p["log_std"], mean.shape)
    return mean, log_std, jnp.exp(log_std)


if __name__ == "__main__":
    key = jax.random.PRNGKey(0)
    k_param, k_x, k_x2 = jax.random.split(key, 3)

    state_dim, action_dim = 16, 4
    hidden_size = (200, 128)  # module defaults

    params = init_params(k_param, state_dim, action_dim, hidden_size, log_std=0.0)
    prep = prepare_policy_params(params)   # one-time: BN fold + pad + bf16 cast

    fwd = jax.jit(policy_forward)

    # Case 1: tiny eval batch (single grid step).
    x = jax.random.normal(k_x, (8, state_dim), jnp.float32)
    mean, log_std, std = fwd(x, prep)
    jax.block_until_ready((mean, log_std, std))
    mean_r, log_std_r, std_r = policy_forward_ref(x, params)
    assert jnp.allclose(mean, mean_r, atol=2e-2), "action_mean mismatch (small batch)"
    assert jnp.allclose(log_std, log_std_r, atol=1e-6), "action_log_std mismatch"
    assert jnp.allclose(std, std_r, atol=1e-5), "action_std mismatch"

    # Case 2: batch large enough to use >= 2 grid steps (multi-tile path).
    x2 = jax.random.normal(k_x2, (48, state_dim), jnp.float32)
    mean2, log_std2, std2 = fwd(x2, prep)
    jax.block_until_ready((mean2, log_std2, std2))
    mean2_r, log_std2_r, std2_r = policy_forward_ref(x2, params)
    assert jnp.allclose(mean2, mean2_r, atol=2e-2), "action_mean mismatch (multi-tile)"
    assert jnp.allclose(log_std2, log_std2_r, atol=1e-6), "action_log_std mismatch"
    assert jnp.allclose(std2, std2_r, atol=1e-5), "action_std mismatch"

    print("KERNEL_OK")
</pallas_src>

<mosaic_0001>
module attributes {stable_mosaic.version = 11 : i64} {
  func.func @_policy_mean_kernel(%arg0: i32, %arg1: memref<16x16xbf16, #tpu.memory_space<vmem>>, %arg2: memref<16x256xbf16, #tpu.memory_space<vmem>>, %arg3: memref<1x256xf32, #tpu.memory_space<vmem>>, %arg4: memref<256x128xbf16, #tpu.memory_space<vmem>>, %arg5: memref<1x128xf32, #tpu.memory_space<vmem>>, %arg6: memref<128x128xbf16, #tpu.memory_space<vmem>>, %arg7: memref<1x128xf32, #tpu.memory_space<vmem>>, %arg8: memref<16x128xbf16, #tpu.memory_space<vmem>>) attributes {dimension_semantics = [#tpu.dimension_semantics<parallel>], iteration_bounds = array<i64: 1>, scalar_prefetch = 0 : i64, scratch_operands = 0 : i64, tpu.core_type = #tpu.core_type<tc>, window_params = [{transform_indices = @transform_0, window_bounds = array<i64: 16, 16>}, {pipeline_mode = #tpu.pipeline_mode<synchronous>, transform_indices = @transform_1, window_bounds = array<i64: 16, 256>}, {pipeline_mode = #tpu.pipeline_mode<synchronous>, transform_indices = @transform_2, window_bounds = array<i64: 1, 256>}, {pipeline_mode = #tpu.pipeline_mode<synchronous>, transform_indices = @transform_3, window_bounds = array<i64: 256, 128>}, {pipeline_mode = #tpu.pipeline_mode<synchronous>, transform_indices = @transform_4, window_bounds = array<i64: 1, 128>}, {pipeline_mode = #tpu.pipeline_mode<synchronous>, transform_indices = @transform_5, window_bounds = array<i64: 128, 128>}, {pipeline_mode = #tpu.pipeline_mode<synchronous>, transform_indices = @transform_6, window_bounds = array<i64: 1, 128>}, {transform_indices = @transform_7, window_bounds = array<i64: 16, 128>}]} {
    %c0 = arith.constant 0 : index
    %c0_0 = arith.constant 0 : index
    %0 = vector.load %arg1[%c0, %c0_0] : memref<16x16xbf16, #tpu.memory_space<vmem>>, vector<16x16xbf16>
    %c0_1 = arith.constant 0 : index
    %c0_2 = arith.constant 0 : index
    %1 = vector.load %arg2[%c0_1, %c0_2] : memref<16x256xbf16, #tpu.memory_space<vmem>>, vector<16x256xbf16>
    %cst = arith.constant dense<0.000000e+00> : vector<16x256xf32>
    %2 = tpu.matmul %0, %1, %cst {dimension_numbers = #tpu.dot_dimension_numbers<[1], [0], [0], [1], [0, 0, 1, 1], [], []>} : vector<16x16xbf16>, vector<16x256xbf16>, vector<16x256xf32> -> vector<16x256xf32>
    %c0_3 = arith.constant 0 : index
    %c0_4 = arith.constant 0 : index
    %3 = vector.load %arg3[%c0_3, %c0_4] : memref<1x256xf32, #tpu.memory_space<vmem>>, vector<1x256xf32>
    %4 = vector.broadcast %3 : vector<1x256xf32> to vector<16x256xf32>
    %5 = arith.addf %2, %4 : vector<16x256xf32>
    %cst_5 = arith.constant 0.000000e+00 : f32
    %6 = vector.broadcast %cst_5 : f32 to vector<16x256xf32>
    %7 = arith.maximumf %5, %6 : vector<16x256xf32>
    %8 = arith.truncf %7 : vector<16x256xf32> to vector<16x256xbf16>
    %c0_6 = arith.constant 0 : index
    %c0_7 = arith.constant 0 : index
    %9 = vector.load %arg4[%c0_6, %c0_7] : memref<256x128xbf16, #tpu.memory_space<vmem>>, vector<256x128xbf16>
    %cst_8 = arith.constant dense<0.000000e+00> : vector<16x128xf32>
    %10 = tpu.matmul %8, %9, %cst_8 {dimension_numbers = #tpu.dot_dimension_numbers<[1], [0], [0], [1], [0, 0, 1, 1], [], []>} : vector<16x256xbf16>, vector<256x128xbf16>, vector<16x128xf32> -> vector<16x128xf32>
    %c0_9 = arith.constant 0 : index
    %c0_10 = arith.constant 0 : index
    %11 = vector.load %arg5[%c0_9, %c0_10] : memref<1x128xf32, #tpu.memory_space<vmem>>, vector<1x128xf32>
    %12 = vector.broadcast %11 : vector<1x128xf32> to vector<16x128xf32>
    %13 = arith.addf %10, %12 : vector<16x128xf32>
    %cst_11 = arith.constant 0.000000e+00 : f32
    %14 = vector.broadcast %cst_11 : f32 to vector<16x128xf32>
    %15 = arith.maximumf %13, %14 : vector<16x128xf32>
    %16 = arith.truncf %15 : vector<16x128xf32> to vector<16x128xbf16>
    %c0_12 = arith.constant 0 : index
    %c0_13 = arith.constant 0 : index
    %17 = vector.load %arg6[%c0_12, %c0_13] : memref<128x128xbf16, #tpu.memory_space<vmem>>, vector<128x128xbf16>
    %cst_14 = arith.constant dense<0.000000e+00> : vector<16x128xf32>
    %18 = tpu.matmul %16, %17, %cst_14 {dimension_numbers = #tpu.dot_dimension_numbers<[1], [0], [0], [1], [0, 0, 1, 1], [], []>} : vector<16x128xbf16>, vector<128x128xbf16>, vector<16x128xf32> -> vector<16x128xf32>
    %c0_15 = arith.constant 0 : index
    %c0_16 = arith.constant 0 : index
    %19 = vector.load %arg7[%c0_15, %c0_16] : memref<1x128xf32, #tpu.memory_space<vmem>>, vector<1x128xf32>
    %20 = vector.broadcast %19 : vector<1x128xf32> to vector<16x128xf32>
    %21 = arith.addf %18, %20 : vector<16x128xf32>
    %22 = math.tanh %21 : vector<16x128xf32>
    %23 = arith.truncf %22 : vector<16x128xf32> to vector<16x128xbf16>
    %c0_17 = arith.constant 0 : index
    %c0_18 = arith.constant 0 : index
    %24 = vector.load %arg8[%c0_17, %c0_18] : memref<16x128xbf16, #tpu.memory_space<vmem>>, vector<16x128xbf16>
    tpu.vector_store %arg8[%c0_17, %c0_18], %23 {strides = array<i32>} : memref<16x128xbf16, #tpu.memory_space<vmem>>, vector<16x128xbf16>,
    return
  }
  func.func @transform_0(%arg0: i32) -> (i32, i32) {
    %c0_i32 = arith.constant 0 : i32
    %c0_i32_0 = arith.constant 0 : i32
    return %arg0, %c0_i32 : i32, i32
  }
  func.func @transform_1(%arg0: i32) -> (i32, i32) {
    %c0_i32 = arith.constant 0 : i32
    %c0_i32_0 = arith.constant 0 : i32
    %c0_i32_1 = arith.constant 0 : i32
    return %c0_i32, %c0_i32_0 : i32, i32
  }
  func.func @transform_2(%arg0: i32) -> (i32, i32) {
    %c0_i32 = arith.constant 0 : i32
    %c0_i32_0 = arith.constant 0 : i32
    %c0_i32_1 = arith.constant 0 : i32
    return %c0_i32, %c0_i32_0 : i32, i32
  }
  func.func @transform_3(%arg0: i32) -> (i32, i32) {
    %c0_i32 = arith.constant 0 : i32
    %c0_i32_0 = arith.constant 0 : i32
    %c0_i32_1 = arith.constant 0 : i32
    return %c0_i32, %c0_i32_0 : i32, i32
  }
  func.func @transform_4(%arg0: i32) -> (i32, i32) {
    %c0_i32 = arith.constant 0 : i32
    %c0_i32_0 = arith.constant 0 : i32
    %c0_i32_1 = arith.constant 0 : i32
    return %c0_i32, %c0_i32_0 : i32, i32
  }
  func.func @transform_5(%arg0: i32) -> (i32, i32) {
    %c0_i32 = arith.constant 0 : i32
    %c0_i32_0 = arith.constant 0 : i32
    %c0_i32_1 = arith.constant 0 : i32
    return %c0_i32, %c0_i32_0 : i32, i32
  }
  func.func @transform_6(%arg0: i32) -> (i32, i32) {
    %c0_i32 = arith.constant 0 : i32
    %c0_i32_0 = arith.constant 0 : i32
    %c0_i32_1 = arith.constant 0 : i32
    return %c0_i32, %c0_i32_0 : i32, i32
  }
  func.func @transform_7(%arg0: i32) -> (i32, i32) {
    %c0_i32 = arith.constant 0 : i32
    %c0_i32_0 = arith.constant 0 : i32
    return %arg0, %c0_i32 : i32, i32
  }
}

</mosaic_0001>

<llo_original>
// kernel: policy_forward.1
$region0: #{policy_forward.1}
  #allocation0 [shape = 'u32[]', space=smem, size = 0x4, offset = 0x4, fixed_abs, tag = 'smem constant byte address 0x4 - core index']
  #allocation1 [shape = 'u32[144,128]{1,0:T(1,128)}', space=vmem, size = 0x12000, scoped, tag = 'internal scratch']
  %s0 = inlined_call_operand.vmem [shape: bf16[16,16], index: 0, kind: input, shape index: {}]
  %s1 = inlined_call_operand.vmem [shape: bf16[16,256], index: 1, kind: input, shape index: {}]
  %s2 = inlined_call_operand.vmem [shape: f32[1,256], index: 2, kind: input, shape index: {}]
  %s3 = inlined_call_operand.hbm [shape: bf16[256,128], index: 3, kind: input, shape index: {}]
  %s4 = inlined_call_operand.vmem [shape: f32[1,128], index: 4, kind: input, shape index: {}]
  %s5 = inlined_call_operand.hbm [shape: bf16[128,128], index: 5, kind: input, shape index: {}]
  %s6 = inlined_call_operand.vmem [shape: f32[1,128], index: 6, kind: input, shape index: {}]
  %s7 = inlined_call_operand.vmem [shape: bf16[16,128], index: 7, kind: output, shape index: {}]
  %s8 = sld [smem:[#allocation0]]
  $region46: #{policy_forward.1} parent=0
    _
  %s10 = ssub.s32 1, %s8
  %s11 = scalar_select 0, %s10, %s8
  $region1: #{policy_forward.1} parent=0
    #allocation2 [shape = 'u8[65536]{0}', space=vmem, size = 0x10000, scoped, tag = 'input window, operand 3, single buffered']
    #allocation3 [shape = 's32[1]{0}', space=sflag, size = 0x4, scoped, tag = 'scoped memory for policy_forward.1']
    #allocation4 [shape = 'u8[32768]{0}', space=vmem, size = 0x8000, scoped, tag = 'input window, operand 5, single buffered']
    #allocation5 [shape = 's32[1]{0}', space=sflag, size = 0x4, scoped, tag = 'scoped memory for policy_forward.1']
    %12 = vsyncpa [#allocation3], 0
    %13 = vsyncpa [#allocation5], 0
    // Predicated region
    $region2: #{policy_forward.1} parent=1 // pred_check
      _
    $region3: #{policy_forward.1} parent=1 // pred_check_branch
      %15 = sbr.rel (0) target = $region5
    $region4: #{policy_forward.1} parent=1 // pred_region
      _
    $region5: #{policy_forward.1} parent=1 // pred_fallthru
      _
    // Predicated region
    $region6: #{policy_forward.1} parent=1 // pred_check
      _
    $region7: #{policy_forward.1} parent=1 // pred_check_branch
      %17 = sbr.rel (0) target = $region9
    $region8: #{policy_forward.1} parent=1 // pred_region
      _
    $region9: #{policy_forward.1} parent=1 // pred_fallthru
      _
    // Predicated region
    $region10: #{policy_forward.1} parent=1 // pred_check
      _
    $region11: #{policy_forward.1} parent=1 // pred_check_branch
      %19 = sbr.rel (0) target = $region13
    $region12: #{policy_forward.1} parent=1 // pred_region
      _
    $region13: #{policy_forward.1} parent=1 // pred_fallthru
      _
    // Predicated region
    $region14: #{policy_forward.1} parent=1 // pred_check
      _
    $region15: #{policy_forward.1} parent=1 // pred_check_branch
      %21 = sbr.rel (0) target = $region17
    $region16: #{policy_forward.1} parent=1 // pred_region
      %s23 = ssub.s32 2048, 2048
      %24 = vsyncadd [#allocation3], %s23
      %s25 = sshll.u32 [#allocation2], 4
      %s26 = int_to_ptr.vmem [resolvable:$true] %s25
      %31 = dma.hbm_to_vmem [thread:$0]  %s3, 2048, %s26, [#allocation3], 64, 64, 4
    $region17: #{policy_forward.1} parent=1 // pred_fallthru
      _
    // Predicated region
    $region18: #{policy_forward.1} parent=1 // pred_check
      _
    $region19: #{policy_forward.1} parent=1 // pred_check_branch
      %33 = sbr.rel (0) target = $region21
    $region20: #{policy_forward.1} parent=1 // pred_region
      _
    $region21: #{policy_forward.1} parent=1 // pred_fallthru
      _
    // Predicated region
    $region22: #{policy_forward.1} parent=1 // pred_check
      _
    $region23: #{policy_forward.1} parent=1 // pred_check_branch
      %35 = sbr.rel (0) target = $region25
    $region24: #{policy_forward.1} parent=1 // pred_region
      %s37 = ssub.s32 1024, 1024
      %38 = vsyncadd [#allocation5], %s37
      %s39 = sshll.u32 [#allocation4], 4
      %s40 = int_to_ptr.vmem [resolvable:$true] %s39
      %45 = dma.hbm_to_vmem [thread:$0]  %s5, 1024, %s40, [#allocation5], 64, 64, 4
    $region25: #{policy_forward.1} parent=1 // pred_fallthru
      _
    // Predicated region
    $region26: #{policy_forward.1} parent=1 // pred_check
      _
    $region27: #{policy_forward.1} parent=1 // pred_check_branch
      %47 = sbr.rel (0) target = $region29
    $region28: #{policy_forward.1} parent=1 // pred_region
      _
    $region29: #{policy_forward.1} parent=1 // pred_fallthru
      _
    // Predicated region
    $region30: #{policy_forward.1} parent=1 // pred_check
      _
    $region31: #{policy_forward.1} parent=1 // pred_check_branch
      %49 = sbr.rel (0) target = $region33
    $region32: #{policy_forward.1} parent=1 // pred_region
      %50 = dma.done [#allocation3], 2048
    $region33: #{policy_forward.1} parent=1 // pred_fallthru
      _
    // Predicated region
    $region34: #{policy_forward.1} parent=1 // pred_check
      _
    $region35: #{policy_forward.1} parent=1 // pred_check_branch
      %52 = sbr.rel (0) target = $region37
    $region36: #{policy_forward.1} parent=1 // pred_region
      %53 = dma.done [#allocation5], 1024
    $region37: #{policy_forward.1} parent=1 // pred_fallthru
      _
    %v55 = vld [vmem:[%s0] sm:$0xf]
    %v56 = vld [vmem:[%s0 + $0x4] sm:$0xf]
    %v57 = vld [vmem:[%s1] sm:$0xff]
    %v58 = vld [vmem:[%s1 + $0x8] sm:$0xff]
    %v59 = vld [vmem:[%s2] sm:$0x3]
    %v61 = vlaneseq
    %v62 = vshrl.u32 %v61, 7
    %v63 = vsub.s32 0, %v62
    %v64 = vrot.slane %v59, %v63
    %v65 = vlaneseq
    %v66 = vshrl.u32 %v65, 7
    %v67 = vsub.s32 1, %v66
    %v68 = vrot.slane %v59, %v67
    %v73 = vunpack.c.l.b16 %v55
    %v74 = vunpack.c.l.b16 %v56
    %v75 = vpack.c.b16 %v74, %v73
    %v78 = vunpack.c.l.b16 %v57
    %v79 = vunpack.c.h.b16 %v57
    %v80 = vunpack.c.l.b16 %v58
    %v81 = vunpack.c.h.b16 %v58
    %v82 = vpack.c.b16 %v80, %v78
    %v83 = vpack.c.b16 %v81, %v79
    %vm86 = vcmask 130048
    %v88 = vsel %vm86, %v75, 0
    %90 = vmatprep.subr.bf16.mxu0 %v83
    %91 = vmatpush1.bf16.msra.mxu0 %v82
    %92 = vmatprep.subr.bf16.mxu0 0
    %93 = vmatpush1.bf16.msra.mxu0 0
    %94 = vmatprep.subr.bf16.mxu0 0
    %95 = vmatpush1.bf16.msra.mxu0 0
    %96 = vmatprep.subr.bf16.mxu0 0
    %97 = vmatpush1.bf16.msra.mxu0 0
    %98 = vmatprep.subr.bf16.mxu0 0
    %99 = vmatpush1.bf16.msra.mxu0 0
    %100 = vmatprep.subr.bf16.mxu0 0
    %101 = vmatpush1.bf16.msra.mxu0 0
    %102 = vmatprep.subr.bf16.mxu0 0
    %103 = vmatpush1.bf16.msra.mxu0 0
    %104 = vmatprep.subr.bf16.mxu0 0
    %105 = vmatpush1.bf16.msra.mxu0 0
    %106 = vmatprep.subr.bf16.mxu0 0
    %107 = vmatpush1.bf16.msra.mxu0 0
    %108 = vmatprep.subr.bf16.mxu0 0
    %109 = vmatpush1.bf16.msra.mxu0 0
    %110 = vmatprep.subr.bf16.mxu0 0
    %111 = vmatpush1.bf16.msra.mxu0 0
    %112 = vmatprep.subr.bf16.mxu0 0
    %113 = vmatpush1.bf16.msra.mxu0 0
    %114 = vmatprep.subr.bf16.mxu0 0
    %115 = vmatpush1.bf16.msra.mxu0 0
    %116 = vmatprep.subr.bf16.mxu0 0
    %117 = vmatpush1.bf16.msra.mxu0 0
    %118 = vmatprep.subr.bf16.mxu0 0
    %119 = vmatpush1.bf16.msra.mxu0 0
    %120 = vmatprep.subr.bf16.mxu0 0
    %121 = vmatpush1.bf16.msra.mxu0 0
    %122 = vmatprep.mubr.bf16.mxu0 0
    %123 = vmatmul.mubr.bf16.gmra.mrb[0].mxu0 %v88
    %v124 = vpop.f32.mrb[0].mxu0
    %v125 = vadd.f32 %v64, %v124
    %v126 = vpop.f32.mrb[0].mxu0
    %v127 = vadd.f32 %v68, %v126
    %v128 = vpop.f32.mrb[0].mxu0
    %v129 = vadd.f32 %v64, %v128
    %v130 = vpop.f32.mrb[0].mxu0
    %v131 = vadd.f32 %v68, %v130
    %132 = vdwg.mxu0
    %v133 = vmax.f32 %v125, 0.0
    %v134 = vmax.f32 %v127, 0.0
    %v135 = vmax.f32 %v129, 0.0
    %v136 = vmax.f32 %v131, 0.0
    %v137 = vpack.c.bf16 %v135, %v133
    %v138 = vpack.c.bf16 %v136, %v134
    %v139 = vld [vmem:[#allocation2] sm:$0xf]
    %v140 = vld [vmem:[#allocation2 + $0x4] sm:$0xf]
    %v141 = vld [vmem:[#allocation2 + $0x8] sm:$0xf]
    %v142 = vld [vmem:[#allocation2 + $0xc] sm:$0xf]
    %v143 = vld [vmem:[#allocation2 + $0x10] sm:$0xf]
    %v144 = vld [vmem:[#allocation2 + $0x14] sm:$0xf]
    %v145 = vld [vmem:[#allocation2 + $0x18] sm:$0xf]
    %v146 = vld [vmem:[#allocation2 + $0x1c] sm:$0xf]
    %v147 = vld [vmem:[#allocation2 + $0x20] sm:$0xf]
    %v148 = vld [vmem:[#allocation2 + $0x24] sm:$0xf]
    %v149 = vld [vmem:[#allocation2 + $0x28] sm:$0xf]
    %v150 = vld [vmem:[#allocation2 + $0x2c] sm:$0xf]
    %v151 = vld [vmem:[#allocation2 + $0x30] sm:$0xf]
    %v152 = vld [vmem:[#allocation2 + $0x34] sm:$0xf]
    %v153 = vld [vmem:[#allocation2 + $0x38] sm:$0xf]
    %v154 = vld [vmem:[#allocation2 + $0x3c] sm:$0xf]
    %v155 = vld [vmem:[#allocation2 + $0x40] sm:$0xf]
    %v156 = vld [vmem:[#allocation2 + $0x44] sm:$0xf]
    %v157 = vld [vmem:[#allocation2 + $0x48] sm:$0xf]
    %v158 = vld [vmem:[#allocation2 + $0x4c] sm:$0xf]
    %v159 = vld [vmem:[#allocation2 + $0x50] sm:$0xf]
    %v160 = vld [vmem:[#allocation2 + $0x54] sm:$0xf]
    %v161 = vld [vmem:[#allocation2 + $0x58] sm:$0xf]
    %v162 = vld [vmem:[#allocation2 + $0x5c] sm:$0xf]
    %v163 = vld [vmem:[#allocation2 + $0x60] sm:$0xf]
    %v164 = vld [vmem:[#allocation2 + $0x64] sm:$0xf]
    %v165 = vld [vmem:[#allocation2 + $0x68] sm:$0xf]
    %v166 = vld [vmem:[#allocation2 + $0x6c] sm:$0xf]
    %v167 = vld [vmem:[#allocation2 + $0x70] sm:$0xf]
    %v168 = vld [vmem:[#allocation2 + $0x74] sm:$0xf]
    %v169 = vld [vmem:[#allocation2 + $0x78] sm:$0xf]
    %v170 = vld [vmem:[#allocation2 + $0x7c] sm:$0xf]
    %v171 = vld [vmem:[%s4] sm:$0x1]
    %v173 = vlaneseq
    %v174 = vshrl.u32 %v173, 7
    %v175 = vsub.s32 0, %v174
    %v176 = vrot.slane %v171, %v175
    %v210 = vunpack.c.l.b16 %v139
    %v211 = vunpack.c.l.b16 %v140
    %v212 = vunpack.c.l.b16 %v141
    %v213 = vunpack.c.l.b16 %v142
    %v214 = vunpack.c.l.b16 %v143
    %v215 = vunpack.c.l.b16 %v144
    %v216 = vunpack.c.l.b16 %v145
    %v217 = vunpack.c.l.b16 %v146
    %v218 = vunpack.c.l.b16 %v147
    %v219 = vunpack.c.l.b16 %v148
    %v220 = vunpack.c.l.b16 %v149
    %v221 = vunpack.c.l.b16 %v150
    %v222 = vunpack.c.l.b16 %v151
    %v223 = vunpack.c.l.b16 %v152
    %v224 = vunpack.c.l.b16 %v153
    %v225 = vunpack.c.l.b16 %v154
    %v226 = vunpack.c.l.b16 %v155
    %v227 = vunpack.c.l.b16 %v156
    %v228 = vunpack.c.l.b16 %v157
    %v229 = vunpack.c.l.b16 %v158
    %v230 = vunpack.c.l.b16 %v159
    %v231 = vunpack.c.l.b16 %v160
    %v232 = vunpack.c.l.b16 %v161
    %v233 = vunpack.c.l.b16 %v162
    %v234 = vunpack.c.l.b16 %v163
    %v235 = vunpack.c.l.b16 %v164
    %v236 = vunpack.c.l.b16 %v165
    %v237 = vunpack.c.l.b16 %v166
    %v238 = vunpack.c.l.b16 %v167
    %v239 = vunpack.c.l.b16 %v168
    %v240 = vunpack.c.l.b16 %v169
    %v241 = vunpack.c.l.b16 %v170
    %v242 = vpack.c.b16 %v211, %v210
    %v243 = vpack.c.b16 %v213, %v212
    %v244 = vpack.c.b16 %v215, %v214
    %v245 = vpack.c.b16 %v217, %v216
    %v246 = vpack.c.b16 %v219, %v218
    %v247 = vpack.c.b16 %v221, %v220
    %v248 = vpack.c.b16 %v223, %v222
    %v249 = vpack.c.b16 %v225, %v224
    %v250 = vpack.c.b16 %v227, %v226
    %v251 = vpack.c.b16 %v229, %v228
    %v252 = vpack.c.b16 %v231, %v230
    %v253 = vpack.c.b16 %v233, %v232
    %v254 = vpack.c.b16 %v235, %v234
    %v255 = vpack.c.b16 %v237, %v236
    %v256 = vpack.c.b16 %v239, %v238
    %v257 = vpack.c.b16 %v241, %v240
    %274 = vmatprep.subr.bf16.mxu0 0
    %275 = vmatpush1.bf16.msra.mxu0 %v242
    %276 = vmatprep.subr.bf16.mxu0 0
    %277 = vmatpush1.bf16.msra.mxu0 %v243
    %278 = vmatprep.subr.bf16.mxu0 0
    %279 = vmatpush1.bf16.msra.mxu0 %v244
    %280 = vmatprep.subr.bf16.mxu0 0
    %281 = vmatpush1.bf16.msra.mxu0 %v245
    %282 = vmatprep.subr.bf16.mxu0 0
    %283 = vmatpush1.bf16.msra.mxu0 %v246
    %284 = vmatprep.subr.bf16.mxu0 0
    %285 = vmatpush1.bf16.msra.mxu0 %v247
    %286 = vmatprep.subr.bf16.mxu0 0
    %287 = vmatpush1.bf16.msra.mxu0 %v248
    %288 = vmatprep.subr.bf16.mxu0 0
    %289 = vmatpush1.bf16.msra.mxu0 %v249
    %290 = vmatprep.subr.bf16.mxu0 0
    %291 = vmatpush1.bf16.msra.mxu0 %v250
    %292 = vmatprep.subr.bf16.mxu0 0
    %293 = vmatpush1.bf16.msra.mxu0 %v251
    %294 = vmatprep.subr.bf16.mxu0 0
    %295 = vmatpush1.bf16.msra.mxu0 %v252
    %296 = vmatprep.subr.bf16.mxu0 0
    %297 = vmatpush1.bf16.msra.mxu0 %v253
    %298 = vmatprep.subr.bf16.mxu0 0
    %299 = vmatpush1.bf16.msra.mxu0 %v254
    %300 = vmatprep.subr.bf16.mxu0 0
    %301 = vmatpush1.bf16.msra.mxu0 %v255
    %302 = vmatprep.subr.bf16.mxu0 0
    %303 = vmatpush1.bf16.msra.mxu0 %v256
    %304 = vmatprep.subr.bf16.mxu0 0
    %305 = vmatpush1.bf16.msra.mxu0 %v257
    %306 = vmatprep.mubr.bf16.mxu0 %v138
    %307 = vmatmul.mubr.bf16.gmra.mrb[0].mxu0 %v137
    %v308 = vpop.f32.mrb[0].mxu0
    %v309 = vadd.f32 %v176, %v308
    %v310 = vpop.f32.mrb[0].mxu0
    %v311 = vpop.f32.mrb[0].mxu0
    %v312 = vadd.f32 %v176, %v311
    %v313 = vpop.f32.mrb[0].mxu0
    %314 = vdwg.mxu0
    %v315 = vmax.f32 %v309, 0.0
    %v316 = vmax.f32 %v312, 0.0
    %v317 = vpack.c.bf16 %v316, %v315
    %v318 = vld [vmem:[#allocation4] sm:$0xf]
    %v319 = vld [vmem:[#allocation4 + $0x4] sm:$0xf]
    %v320 = vld [vmem:[#allocation4 + $0x8] sm:$0xf]
    %v321 = vld [vmem:[#allocation4 + $0xc] sm:$0xf]
    %v322 = vld [vmem:[#allocation4 + $0x10] sm:$0xf]
    %v323 = vld [vmem:[#allocation4 + $0x14] sm:$0xf]
    %v324 = vld [vmem:[#allocation4 + $0x18] sm:$0xf]
    %v325 = vld [vmem:[#allocation4 + $0x1c] sm:$0xf]
    %v326 = vld [vmem:[#allocation4 + $0x20] sm:$0xf]
    %v327 = vld [vmem:[#allocation4 + $0x24] sm:$0xf]
    %v328 = vld [vmem:[#allocation4 + $0x28] sm:$0xf]
    %v329 = vld [vmem:[#allocation4 + $0x2c] sm:$0xf]
    %v330 = vld [vmem:[#allocation4 + $0x30] sm:$0xf]
    %v331 = vld [vmem:[#allocation4 + $0x34] sm:$0xf]
    %v332 = vld [vmem:[#allocation4 + $0x38] sm:$0xf]
    %v333 = vld [vmem:[#allocation4 + $0x3c] sm:$0xf]
    %v334 = vld [vmem:[%s6] sm:$0x1]
    %v336 = vlaneseq
    %v337 = vshrl.u32 %v336, 7
    %v338 = vsub.s32 0, %v337
    %v339 = vrot.slane %v334, %v338
    %v357 = vunpack.c.l.b16 %v318
    %v358 = vunpack.c.l.b16 %v319
    %v359 = vunpack.c.l.b16 %v320
    %v360 = vunpack.c.l.b16 %v321
    %v361 = vunpack.c.l.b16 %v322
    %v362 = vunpack.c.l.b16 %v323
    %v363 = vunpack.c.l.b16 %v324
    %v364 = vunpack.c.l.b16 %v325
    %v365 = vunpack.c.l.b16 %v326
    %v366 = vunpack.c.l.b16 %v327
    %v367 = vunpack.c.l.b16 %v328
    %v368 = vunpack.c.l.b16 %v329
    %v369 = vunpack.c.l.b16 %v330
    %v370 = vunpack.c.l.b16 %v331
    %v371 = vunpack.c.l.b16 %v332
    %v372 = vunpack.c.l.b16 %v333
    %v373 = vpack.c.b16 %v358, %v357
    %v374 = vpack.c.b16 %v360, %v359
    %v375 = vpack.c.b16 %v362, %v361
    %v376 = vpack.c.b16 %v364, %v363
    %v377 = vpack.c.b16 %v366, %v365
    %v378 = vpack.c.b16 %v368, %v367
    %v379 = vpack.c.b16 %v370, %v369
    %v380 = vpack.c.b16 %v372, %v371
    %389 = vmatprep.subr.bf16.mxu0 0
    %390 = vmatpush1.bf16.msra.mxu0 %v373
    %391 = vmatprep.subr.bf16.mxu0 0
    %392 = vmatpush1.bf16.msra.mxu0 %v374
    %393 = vmatprep.subr.bf16.mxu0 0
    %394 = vmatpush1.bf16.msra.mxu0 %v375
    %395 = vmatprep.subr.bf16.mxu0 0
    %396 = vmatpush1.bf16.msra.mxu0 %v376
    %397 = vmatprep.subr.bf16.mxu0 0
    %398 = vmatpush1.bf16.msra.mxu0 %v377
    %399 = vmatprep.subr.bf16.mxu0 0
    %400 = vmatpush1.bf16.msra.mxu0 %v378
    %401 = vmatprep.subr.bf16.mxu0 0
    %402 = vmatpush1.bf16.msra.mxu0 %v379
    %403 = vmatprep.subr.bf16.mxu0 0
    %404 = vmatpush1.bf16.msra.mxu0 %v380
    %405 = vmatprep.subr.bf16.mxu0 0
    %406 = vmatpush1.bf16.msra.mxu0 0
    %407 = vmatprep.subr.bf16.mxu0 0
    %408 = vmatpush1.bf16.msra.mxu0 0
    %409 = vmatprep.subr.bf16.mxu0 0
    %410 = vmatpush1.bf16.msra.mxu0 0
    %411 = vmatprep.subr.bf16.mxu0 0
    %412 = vmatpush1.bf16.msra.mxu0 0
    %413 = vmatprep.subr.bf16.mxu0 0
    %414 = vmatpush1.bf16.msra.mxu0 0
    %415 = vmatprep.subr.bf16.mxu0 0
    %416 = vmatpush1.bf16.msra.mxu0 0
    %417 = vmatprep.subr.bf16.mxu0 0
    %418 = vmatpush1.bf16.msra.mxu0 0
    %419 = vmatprep.subr.bf16.mxu0 0
    %420 = vmatpush1.bf16.msra.mxu0 0
    %421 = vmatprep.mubr.bf16.mxu0 0
    %422 = vmatmul.mubr.bf16.gmra.mrb[0].mxu0 %v317
    %v423 = vpop.f32.mrb[0].mxu0
    %v424 = vadd.f32 %v339, %v423
    %v425 = vpop.f32.mrb[0].mxu0
    %v426 = vpop.f32.mrb[0].mxu0
    %v427 = vadd.f32 %v339, %v426
    %v428 = vpop.f32.mrb[0].mxu0
    %429 = vdwg.mxu0
    %v430 = vtanh.pop %v424
    %v431 = vtanh.pop %v427
    %v432 = vpack.c.bf16 %v431, %v430
    %v434 = vunpack.c.l.b16 %v432
    %v435 = vunpack.c.h.b16 %v432
    %v436 = vpack.c.b16 %v434, %v434
    %v437 = vpack.c.b16 %v435, %v435
    %440 = vst [vmem:[%s7] sm:$0xf] %v436
    %441 = vst [vmem:[%s7 + $0x4] sm:$0xf] %v437
    // Predicated region
    $region38: #{policy_forward.1} parent=1 // pred_check
      _
    $region39: #{policy_forward.1} parent=1 // pred_check_branch
      %443 = sbr.rel (0) target = $region41
    $region40: #{policy_forward.1} parent=1 // pred_region
      _
    $region41: #{policy_forward.1} parent=1 // pred_fallthru
      _
    // Predicated region
    $region42: #{policy_forward.1} parent=1 // pred_check
      _
    $region43: #{policy_forward.1} parent=1 // pred_check_branch
      %445 = sbr.rel (0) target = $region45
    $region44: #{policy_forward.1} parent=1 // pred_region
      _
    $region45: #{policy_forward.1} parent=1 // pred_fallthru
      _
    %446 = vsyncpa [#allocation3], 1
    %447 = vsyncpa [#allocation5], 1

</llo_original>
